<compile_context>
chip_gen: v7x
topology: tpu7x:2x2x1
jax: 0.10.0
libtpu: 0.0.40
codegen_flags: <defaults>
</compile_context>

<pallas_src>
import jax
import jax.numpy as jnp
from jax.experimental import pallas as pl
from jax.experimental.pallas import tpu as pltpu

B = 2            # batch
L_IN = 30        # input length (Conv1d k=5 -> 26, MaxPool1d(2) -> 13 => 128*13 flatten)
K = 5            # conv kernel size
K_PAD = 8        # im2col tap padding (tap 5 = constant 1 for the folded conv bias)
C_OUT = 128      # conv out channels
L_CONV = L_IN - K + 1      # 26
L_POOL = L_CONV // 2       # 13
H1 = 100
H1_PAD = 128               # lane-dense Dense1 width (lane 100 = constant 1 for folded b2)
H2 = 33
BN_EPS = 1e-5


def pnet_kernel(p_ref, cw_ref, vecs_ref, w1_ref, w2_ref, out_ref):
    n = out_ref.shape[0]                              # batch (static)

    # ---- Conv1d(1 -> 128, k=5) + bias (folded as a ones-tap) + ReLU:
    #      one im2col matmul.  Row r = p*13n + t*n + b -> window start 2t + p.
    h = jnp.dot(p_ref[...], cw_ref[...], preferred_element_type=jnp.float32)  # (26n, 128)
    h = jnp.maximum(h, 0.0)
    # Dropout(0.3): identity in inference mode.
    # TODO(synk): training-mode stochastic dropout not implemented (inference identity).

    # ---- BatchNorm1d(128), eval mode: precomputed affine (rows 0/1 of vecs) ----
    h = h * vecs_ref[0:1, :] + vecs_ref[1:2, :]

    # ---- MaxPool1d(2): rows [0,13n) hold time 2t, rows [13n,26n) hold time 2t+1 ----
    half = L_POOL * n
    pooled = jnp.maximum(h[:half, :], h[half:, :])    # (13n, 128), row = t*n + b

    # ---- Flatten to (n, 13*128), feature index t*128 + c (w1 permuted in glue) ----
    f = jnp.concatenate(
        [pooled[t * n:(t + 1) * n, :] for t in range(L_POOL)], axis=1)     # (n, 1664)

    # ---- Dense1 (1664 -> 100, zero-padded to 128 lanes): single K=1664 MXU dot.
    #      Bias row 2 of vecs; lane 100 of the bias is 1.0 so z1[:,100] == 1 after ReLU.
    w1 = w1_ref[...].astype(jnp.float32)              # bf16 in memory, f32 on the MXU
    z1 = jnp.dot(f, w1, preferred_element_type=jnp.float32) + vecs_ref[2:3, :]
    z1 = jnp.maximum(z1, 0.0)                         # padded lanes 101..127 stay exactly 0
    # Dropout(0.3): identity in inference mode.

    # ---- Dense2 (100 -> 33): b2 folded into w2 row 100 (the constant-1 lane) + softmax ----
    z2 = jnp.dot(z1, w2_ref[...], preferred_element_type=jnp.float32)       # (n, 33)
    m = jnp.max(z2, axis=1, keepdims=True)
    e = jnp.exp(z2 - m)
    out_ref[...] = e / jnp.sum(e, axis=1, keepdims=True)


def pnet_forward(x_ncl, params):
    """x_ncl: (B, 1, 30) float32, PyTorch NCL layout."""
    n = x_ncl.shape[0]
    xs = x_ncl[:, 0, :].astype(jnp.float32)                               # (n, 30)

    # im2col with the max-pool pairing baked into the row order:
    #   row r = p*13*n + t*n + b  ->  conv window starting at time 2t + p.
    start = 2 * jnp.arange(L_POOL)[None, :] + jnp.arange(2)[:, None]      # (2, 13)
    gidx = start[:, :, None] + jnp.arange(K)[None, None, :]               # (2, 13, 5)
    patches = xs[:, gidx]                                                 # (n, 2, 13, 5)
    patches = jnp.transpose(patches, (1, 2, 0, 3)).reshape(2 * L_POOL * n, K)
    rows = patches.shape[0]
    patches = jnp.concatenate(                                            # (26n, 8)
        [patches,
         jnp.ones((rows, 1), jnp.float32),                                # tap 5 = 1 (conv bias)
         jnp.zeros((rows, K_PAD - K - 1), jnp.float32)], axis=1)

    # Conv weight: tap-major (5,128); row 5 carries conv_b; rows 6..7 zero.
    cw_aug = jnp.concatenate(
        [jnp.transpose(params["conv_w"][:, 0, :], (1, 0)),
         params["conv_b"][None, :].astype(jnp.float32),
         jnp.zeros((K_PAD - K - 1, C_OUT), jnp.float32)], axis=0)         # (8, 128)

    # BatchNorm1d (eval) folded to a single affine host-side; packed with b1 into one array.
    scale = params["bn_gamma"] * jax.lax.rsqrt(params["bn_var"] + BN_EPS)  # (128,)
    shift = params["bn_beta"] - params["bn_mean"] * scale                  # (128,)
    b1p = jnp.concatenate(                                                 # (128,)
        [params["b1"],
         jnp.ones((1,), jnp.float32),                                      # lane 100 = 1 (for b2)
         jnp.zeros((H1_PAD - H1 - 1,), jnp.float32)])
    vecs = jnp.stack([scale, shift, b1p], axis=0)                          # (3, 128)

    # Dense1: PyTorch flatten order is c*13 + t; kernel uses t*128 + c.
    # Pad output dim 100 -> 128 with ZERO cols (lane 100 must be zero so z1[:,100] == 1)
    # and store as bf16 (halves the dominant DMA).
    w1p = jnp.transpose(params["w1"].reshape(H1, C_OUT, L_POOL), (2, 1, 0))
    w1p = w1p.reshape(L_POOL * C_OUT, H1)
    w1p = jnp.pad(w1p, ((0, 0), (0, H1_PAD - H1))).astype(jnp.bfloat16)    # (1664, 128)

    # Dense2: input rows padded 100 -> 128; row 100 carries b2 (constant-1 lane of z1).
    w2p = jnp.concatenate(
        [jnp.transpose(params["w2"], (1, 0)),
         params["b2"][None, :].astype(jnp.float32),
         jnp.zeros((H1_PAD - H1 - 1, H2), jnp.float32)], axis=0)           # (128, 33)

    vmem = pl.BlockSpec(memory_space=pltpu.MemorySpace.VMEM)
    return pl.pallas_call(
        pnet_kernel,
        out_shape=jax.ShapeDtypeStruct((n, H2), jnp.float32),
        in_specs=[vmem] * 5,
        out_specs=vmem,
    )(patches, cw_aug, vecs, w1p, w2p)


def pnet_reference(x_ncl, params):
    """Pure-JAX reference mirroring the PyTorch module (eval mode) in NCL layout."""
    xs = x_ncl[:, 0, :]                                                   # (B, 30)
    cw = params["conv_w"][:, 0, :]                                        # (128, 5)
    patches = jnp.stack([xs[:, k:k + L_CONV] for k in range(K)], axis=-1)  # (B, 26, 5)
    conv = jnp.einsum("btk,ck->bct", patches, cw,
                      precision=jax.lax.Precision.HIGHEST) \
        + params["conv_b"][None, :, None]
    h = jax.nn.relu(conv)
    h = (h - params["bn_mean"][None, :, None]) * jax.lax.rsqrt(
        params["bn_var"][None, :, None] + BN_EPS) * params["bn_gamma"][None, :, None] \
        + params["bn_beta"][None, :, None]
    h = h.reshape(h.shape[0], C_OUT, L_POOL, 2).max(axis=-1)              # MaxPool1d(2)
    f = h.reshape(h.shape[0], C_OUT * L_POOL)                             # Flatten
    z1 = jax.nn.relu(jnp.dot(f, params["w1"].T,
                             precision=jax.lax.Precision.HIGHEST) + params["b1"])
    z2 = jnp.dot(z1, params["w2"].T,
                 precision=jax.lax.Precision.HIGHEST) + params["b2"]
    return jax.nn.softmax(z2, axis=1)


if __name__ == "__main__":
    key = jax.random.PRNGKey(0)
    keys = jax.random.split(key, 11)
    params = {
        "conv_w": jax.random.normal(keys[0], (C_OUT, 1, K), jnp.float32) * (1.0 / K ** 0.5),
        "conv_b": jax.random.normal(keys[1], (C_OUT,), jnp.float32) * 0.1,
        "bn_gamma": jax.random.uniform(keys[2], (C_OUT,), jnp.float32, 0.5, 1.5),
        "bn_beta": jax.random.normal(keys[3], (C_OUT,), jnp.float32) * 0.1,
        "bn_mean": jax.random.normal(keys[4], (C_OUT,), jnp.float32) * 0.1,
        "bn_var": jax.random.uniform(keys[5], (C_OUT,), jnp.float32, 0.5, 1.5),
        "w1": jax.random.normal(keys[6], (H1, C_OUT * L_POOL), jnp.float32)
              * (1.0 / (C_OUT * L_POOL) ** 0.5),
        "b1": jax.random.normal(keys[7], (H1,), jnp.float32) * 0.1,
        "w2": jax.random.normal(keys[8], (H2, H1), jnp.float32) * (1.0 / H1 ** 0.5),
        "b2": jax.random.normal(keys[9], (H2,), jnp.float32) * 0.1,
    }
    x = jax.random.normal(keys[10], (B, 1, L_IN), jnp.float32)

    out = jax.block_until_ready(pnet_forward(x, params))
    ref = pnet_reference(x, params)

    assert out.shape == (B, H2)
    assert jnp.allclose(jnp.sum(out, axis=1), 1.0, atol=1e-4)
    # Tolerance loosened slightly vs. pure-f32 (2e-3) because w1 is stored in bf16.
    assert jnp.allclose(out, ref, atol=3e-3, rtol=3e-3)
    print("KERNEL_OK")
</pallas_src>

<mosaic_0001>
module attributes {stable_mosaic.version = 11 : i64} {
  func.func @pnet_kernel(%arg0: memref<52x8xf32, #tpu.memory_space<vmem>>, %arg1: memref<8x128xf32, #tpu.memory_space<vmem>>, %arg2: memref<3x128xf32, #tpu.memory_space<vmem>>, %arg3: memref<1664x128xbf16, #tpu.memory_space<vmem>>, %arg4: memref<128x33xf32, #tpu.memory_space<vmem>>, %arg5: memref<2x33xf32, #tpu.memory_space<vmem>>) attributes {dimension_semantics = [], scalar_prefetch = 0 : i64, scratch_operands = 0 : i64, tpu.core_type = #tpu.core_type<tc>} {
    %c0 = arith.constant 0 : index
    %c0_0 = arith.constant 0 : index
    %0 = vector.load %arg0[%c0, %c0_0] : memref<52x8xf32, #tpu.memory_space<vmem>>, vector<52x8xf32>
    %c0_1 = arith.constant 0 : index
    %c0_2 = arith.constant 0 : index
    %1 = vector.load %arg1[%c0_1, %c0_2] : memref<8x128xf32, #tpu.memory_space<vmem>>, vector<8x128xf32>
    %cst = arith.constant dense<0.000000e+00> : vector<52x128xf32>
    %2 = tpu.matmul %0, %1, %cst {dimension_numbers = #tpu.dot_dimension_numbers<[1], [0], [0], [1], [0, 0, 1, 1], [], []>} : vector<52x8xf32>, vector<8x128xf32>, vector<52x128xf32> -> vector<52x128xf32>
    %cst_3 = arith.constant 0.000000e+00 : f32
    %3 = vector.broadcast %cst_3 : f32 to vector<52x128xf32>
    %4 = arith.maximumf %2, %3 : vector<52x128xf32>
    %c0_4 = arith.constant 0 : index
    %c0_5 = arith.constant 0 : index
    %5 = vector.load %arg2[%c0_4, %c0_5] : memref<3x128xf32, #tpu.memory_space<vmem>>, vector<1x128xf32>
    %6 = vector.broadcast %5 : vector<1x128xf32> to vector<52x128xf32>
    %7 = arith.mulf %4, %6 : vector<52x128xf32>
    %c1 = arith.constant 1 : index
    %c0_6 = arith.constant 0 : index
    %8 = vector.load %arg2[%c1, %c0_6] : memref<3x128xf32, #tpu.memory_space<vmem>>, vector<1x128xf32>
    %9 = vector.broadcast %8 : vector<1x128xf32> to vector<52x128xf32>
    %10 = arith.addf %7, %9 : vector<52x128xf32>
    %11 = vector.extract_strided_slice %10 {offsets = [0, 0], sizes = [26, 128], strides = [1, 1]} : vector<52x128xf32> to vector<26x128xf32>
    %12 = vector.extract_strided_slice %10 {offsets = [26, 0], sizes = [26, 128], strides = [1, 1]} : vector<52x128xf32> to vector<26x128xf32>
    %13 = arith.maximumf %11, %12 : vector<26x128xf32>
    %14 = vector.extract_strided_slice %13 {offsets = [0, 0], sizes = [2, 128], strides = [1, 1]} : vector<26x128xf32> to vector<2x128xf32>
    %15 = vector.extract_strided_slice %13 {offsets = [2, 0], sizes = [2, 128], strides = [1, 1]} : vector<26x128xf32> to vector<2x128xf32>
    %16 = vector.extract_strided_slice %13 {offsets = [4, 0], sizes = [2, 128], strides = [1, 1]} : vector<26x128xf32> to vector<2x128xf32>
    %17 = vector.extract_strided_slice %13 {offsets = [6, 0], sizes = [2, 128], strides = [1, 1]} : vector<26x128xf32> to vector<2x128xf32>
    %18 = vector.extract_strided_slice %13 {offsets = [8, 0], sizes = [2, 128], strides = [1, 1]} : vector<26x128xf32> to vector<2x128xf32>
    %19 = vector.extract_strided_slice %13 {offsets = [10, 0], sizes = [2, 128], strides = [1, 1]} : vector<26x128xf32> to vector<2x128xf32>
    %20 = vector.extract_strided_slice %13 {offsets = [12, 0], sizes = [2, 128], strides = [1, 1]} : vector<26x128xf32> to vector<2x128xf32>
    %21 = vector.extract_strided_slice %13 {offsets = [14, 0], sizes = [2, 128], strides = [1, 1]} : vector<26x128xf32> to vector<2x128xf32>
    %22 = vector.extract_strided_slice %13 {offsets = [16, 0], sizes = [2, 128], strides = [1, 1]} : vector<26x128xf32> to vector<2x128xf32>
    %23 = vector.extract_strided_slice %13 {offsets = [18, 0], sizes = [2, 128], strides = [1, 1]} : vector<26x128xf32> to vector<2x128xf32>
    %24 = vector.extract_strided_slice %13 {offsets = [20, 0], sizes = [2, 128], strides = [1, 1]} : vector<26x128xf32> to vector<2x128xf32>
    %25 = vector.extract_strided_slice %13 {offsets = [22, 0], sizes = [2, 128], strides = [1, 1]} : vector<26x128xf32> to vector<2x128xf32>
    %26 = vector.extract_strided_slice %13 {offsets = [24, 0], sizes = [2, 128], strides = [1, 1]} : vector<26x128xf32> to vector<2x128xf32>
    %27 = tpu.concatenate %14, %15, %16, %17, %18, %19, %20, %21, %22, %23, %24, %25, %26 in 1 : vector<2x128xf32>, vector<2x128xf32>, vector<2x128xf32>, vector<2x128xf32>, vector<2x128xf32>, vector<2x128xf32>, vector<2x128xf32>, vector<2x128xf32>, vector<2x128xf32>, vector<2x128xf32>, vector<2x128xf32>, vector<2x128xf32>, vector<2x128xf32> -> vector<2x1664xf32>
    %c0_7 = arith.constant 0 : index
    %c0_8 = arith.constant 0 : index
    %28 = vector.load %arg3[%c0_7, %c0_8] : memref<1664x128xbf16, #tpu.memory_space<vmem>>, vector<1664x128xbf16>
    %29 = arith.extf %28 : vector<1664x128xbf16> to vector<1664x128xf32>
    %cst_9 = arith.constant dense<0.000000e+00> : vector<2x128xf32>
    %30 = tpu.matmul %27, %29, %cst_9 {dimension_numbers = #tpu.dot_dimension_numbers<[1], [0], [0], [1], [0, 0, 1, 1], [], []>} : vector<2x1664xf32>, vector<1664x128xf32>, vector<2x128xf32> -> vector<2x128xf32>
    %c2 = arith.constant 2 : index
    %c0_10 = arith.constant 0 : index
    %31 = vector.load %arg2[%c2, %c0_10] : memref<3x128xf32, #tpu.memory_space<vmem>>, vector<1x128xf32>
    %32 = vector.broadcast %31 : vector<1x128xf32> to vector<2x128xf32>
    %33 = arith.addf %30, %32 : vector<2x128xf32>
    %cst_11 = arith.constant 0.000000e+00 : f32
    %34 = vector.broadcast %cst_11 : f32 to vector<2x128xf32>
    %35 = arith.maximumf %33, %34 : vector<2x128xf32>
    %c0_12 = arith.constant 0 : index
    %c0_13 = arith.constant 0 : index
    %36 = vector.load %arg4[%c0_12, %c0_13] : memref<128x33xf32, #tpu.memory_space<vmem>>, vector<128x33xf32>
    %cst_14 = arith.constant dense<0.000000e+00> : vector<2x33xf32>
    %37 = tpu.matmul %35, %36, %cst_14 {dimension_numbers = #tpu.dot_dimension_numbers<[1], [0], [0], [1], [0, 0, 1, 1], [], []>} : vector<2x128xf32>, vector<128x33xf32>, vector<2x33xf32> -> vector<2x33xf32>
    %cst_15 = arith.constant dense<0xFF800000> : vector<2xf32>
    %38 = vector.multi_reduction <maximumf>, %37, %cst_15 [1] : vector<2x33xf32> to vector<2xf32>
    %39 = vector.shape_cast %38 : vector<2xf32> to vector<2x1xf32>
    %40 = vector.broadcast %39 : vector<2x1xf32> to vector<2x33xf32>
    %41 = arith.subf %37, %40 : vector<2x33xf32>
    %42 = math.exp %41 : vector<2x33xf32>
    %cst_16 = arith.constant dense<0.000000e+00> : vector<2xf32>
    %43 = vector.multi_reduction <add>, %42, %cst_16 [1] : vector<2x33xf32> to vector<2xf32>
    %44 = vector.shape_cast %43 : vector<2xf32> to vector<2x1xf32>
    %45 = vector.broadcast %44 : vector<2x1xf32> to vector<2x33xf32>
    %46 = arith.divf %42, %45 : vector<2x33xf32>
    %c0_17 = arith.constant 0 : index
    %c0_18 = arith.constant 0 : index
    %47 = vector.load %arg5[%c0_17, %c0_18] : memref<2x33xf32, #tpu.memory_space<vmem>>, vector<2x33xf32>
    tpu.vector_store %arg5[%c0_17, %c0_18], %46 {strides = array<i32>} : memref<2x33xf32, #tpu.memory_space<vmem>>, vector<2x33xf32>,
    return
  }
}

</mosaic_0001>

<llo_original>
// kernel: tpu_custom_call.1
$region0: #{tpu_custom_call.1}
  #allocation0 [shape = 'u32[]', space=smem, size = 0x4, offset = 0x4, fixed_abs, tag = 'smem constant byte address 0x4 - core index']
  #allocation1 [shape = 'u32[144,128]{1,0:T(1,128)}', space=vmem, size = 0x12000, scoped, tag = 'internal scratch']
  %s0 = inlined_call_operand.vmem [shape: f32[52,8], index: 0, kind: input, shape index: {}]
  %s1 = inlined_call_operand.vmem [shape: f32[8,128], index: 1, kind: input, shape index: {}]
  %s2 = inlined_call_operand.vmem [shape: f32[3,128], index: 2, kind: input, shape index: {}]
  %s3 = inlined_call_operand.hbm [shape: bf16[1664,128], index: 3, kind: input, shape index: {}]
  %s4 = inlined_call_operand.vmem [shape: f32[128,33], index: 4, kind: input, shape index: {}]
  %s5 = inlined_call_operand.hbm [shape: f32[2,33], index: 5, kind: output, shape index: {}]
  %s6 = sld [smem:[#allocation0]]
  $region34: #{tpu_custom_call.1} parent=0
    _
  %s8 = ssub.s32 1, %s6
  %s9 = scalar_select 0, %s8, %s6
  $region1: #{tpu_custom_call.1} parent=0
    #allocation2 [shape = 'u8[425984]{0}', space=vmem, size = 0x68000, scoped, tag = 'input window, operand 3, single buffered']
    #allocation3 [shape = 's32[1]{0}', space=sflag, size = 0x4, scoped, tag = 'scoped memory for tpu_custom_call.1']
    #allocation4 [shape = 's32[1]{0}', space=sflag, size = 0x4, scoped, tag = 'scoped memory for tpu_custom_call.1']
    #allocation5 [shape = 'u8[1024]{0}', space=vmem, size = 0x400, scoped, tag = 'output window, operand 0, single buffered']
    %10 = vsyncpa [#allocation3], 0
    %11 = vsyncpa [#allocation4], 0
    // Predicated region
    $region2: #{tpu_custom_call.1} parent=1 // pred_check
      _
    $region3: #{tpu_custom_call.1} parent=1 // pred_check_branch
      %13 = sbr.rel (0) target = $region5
    $region4: #{tpu_custom_call.1} parent=1 // pred_region
      _
    $region5: #{tpu_custom_call.1} parent=1 // pred_fallthru
      _
    // Predicated region
    $region6: #{tpu_custom_call.1} parent=1 // pred_check
      _
    $region7: #{tpu_custom_call.1} parent=1 // pred_check_branch
      %15 = sbr.rel (0) target = $region9
    $region8: #{tpu_custom_call.1} parent=1 // pred_region
      _
    $region9: #{tpu_custom_call.1} parent=1 // pred_fallthru
      _
    // Predicated region
    $region10: #{tpu_custom_call.1} parent=1 // pred_check
      _
    $region11: #{tpu_custom_call.1} parent=1 // pred_check_branch
      %17 = sbr.rel (0) target = $region13
    $region12: #{tpu_custom_call.1} parent=1 // pred_region
      _
    $region13: #{tpu_custom_call.1} parent=1 // pred_fallthru
      _
    // Predicated region
    $region14: #{tpu_custom_call.1} parent=1 // pred_check
      _
    $region15: #{tpu_custom_call.1} parent=1 // pred_check_branch
      %19 = sbr.rel (0) target = $region17
    $region16: #{tpu_custom_call.1} parent=1 // pred_region
      %s21 = ssub.s32 13312, 13312
      %22 = vsyncadd [#allocation3], %s21
      %s23 = sshll.u32 [#allocation2], 4
      %s24 = int_to_ptr.vmem [resolvable:$true] %s23
      %29 = dma.hbm_to_vmem [thread:$0]  %s3, 13312, %s24, [#allocation3], 64, 64, 4
    $region17: #{tpu_custom_call.1} parent=1 // pred_fallthru
      _
    // Predicated region
    $region18: #{tpu_custom_call.1} parent=1 // pred_check
      _
    $region19: #{tpu_custom_call.1} parent=1 // pred_check_branch
      %31 = sbr.rel (0) target = $region21
    $region20: #{tpu_custom_call.1} parent=1 // pred_region
      _
    $region21: #{tpu_custom_call.1} parent=1 // pred_fallthru
      _
    // Predicated region
    $region22: #{tpu_custom_call.1} parent=1 // pred_check
      _
    $region23: #{tpu_custom_call.1} parent=1 // pred_check_branch
      %33 = sbr.rel (0) target = $region25
    $region24: #{tpu_custom_call.1} parent=1 // pred_region
      %34 = dma.done [#allocation3], 13312
    $region25: #{tpu_custom_call.1} parent=1 // pred_fallthru
      _
    %v35 = vld [vmem:[%s0] sm:$0xff]
    %v36 = vld [vmem:[%s0 + $0x8] sm:$0xff]
    %v37 = vld [vmem:[%s0 + $0x10] sm:$0xff]
    %v38 = vld [vmem:[%s0 + $0x18] sm:$0xff]
    %v39 = vld [vmem:[%s0 + $0x20] sm:$0xff]
    %v40 = vld [vmem:[%s0 + $0x28] sm:$0xff]
    %v41 = vld [vmem:[%s0 + $0x30] sm:$0xf]
    %v42 = vld [vmem:[%s1] sm:$0xff]
    %vm43 = vcmask 64512
    %v45 = vsel %vm43, %v35, 0
    %v48 = vsel %vm43, %v36, 0
    %v51 = vsel %vm43, %v37, 0
    %v54 = vsel %vm43, %v38, 0
    %v57 = vsel %vm43, %v39, 0
    %v60 = vsel %vm43, %v40, 0
    %v63 = vsel %vm43, %v41, 0
    %65 = vmatprep.subr.mxu0 0.0
    %66 = vmatpush1.msra.mxu0 %v42
    %67 = vmatprep.subr.mxu0 0.0
    %68 = vmatpush1.msra.mxu0 0.0
    %69 = vmatprep.subr.mxu0 0.0
    %70 = vmatpush1.msra.mxu0 0.0
    %71 = vmatprep.subr.mxu0 0.0
    %72 = vmatpush1.msra.mxu0 0.0
    %73 = vmatprep.subr.mxu0 0.0
    %74 = vmatpush1.msra.mxu0 0.0
    %75 = vmatprep.subr.mxu0 0.0
    %76 = vmatpush1.msra.mxu0 0.0
    %77 = vmatprep.subr.mxu0 0.0
    %78 = vmatpush1.msra.mxu0 0.0
    %79 = vmatprep.subr.mxu0 0.0
    %80 = vmatpush1.msra.mxu0 0.0
    %81 = vmatprep.subr.mxu0 0.0
    %82 = vmatpush1.msra.mxu0 0.0
    %83 = vmatprep.subr.mxu0 0.0
    %84 = vmatpush1.msra.mxu0 0.0
    %85 = vmatprep.subr.mxu0 0.0
    %86 = vmatpush1.msra.mxu0 0.0
    %87 = vmatprep.subr.mxu0 0.0
    %88 = vmatpush1.msra.mxu0 0.0
    %89 = vmatprep.subr.mxu0 0.0
    %90 = vmatpush1.msra.mxu0 0.0
    %91 = vmatprep.subr.mxu0 0.0
    %92 = vmatpush1.msra.mxu0 0.0
    %93 = vmatprep.subr.mxu0 0.0
    %94 = vmatpush1.msra.mxu0 0.0
    %95 = vmatprep.subr.mxu0 0.0
    %96 = vmatpush1.msra.mxu0 0.0
    %97 = vmatprep.subr.mxu0 0.0
    %98 = vmatpush1.msra.mxu0 0.0
    %99 = vmatprep.subr.mxu0 0.0
    %100 = vmatpush1.msra.mxu0 0.0
    %101 = vmatprep.subr.mxu0 0.0
    %102 = vmatpush1.msra.mxu0 0.0
    %103 = vmatprep.subr.mxu0 0.0
    %104 = vmatpush1.msra.mxu0 0.0
    %105 = vmatprep.subr.mxu0 0.0
    %106 = vmatpush1.msra.mxu0 0.0
    %107 = vmatprep.subr.mxu0 0.0
    %108 = vmatpush1.msra.mxu0 0.0
    %109 = vmatprep.subr.mxu0 0.0
    %110 = vmatpush1.msra.mxu0 0.0
    %111 = vmatprep.subr.mxu0 0.0
    %112 = vmatpush1.msra.mxu0 0.0
    %113 = vmatprep.subr.mxu0 0.0
    %114 = vmatpush1.msra.mxu0 0.0
    %115 = vmatprep.subr.mxu0 0.0
    %116 = vmatpush1.msra.mxu0 0.0
    %117 = vmatprep.subr.mxu0 0.0
    %118 = vmatpush1.msra.mxu0 0.0
    %119 = vmatprep.subr.mxu0 0.0
    %120 = vmatpush1.msra.mxu0 0.0
    %121 = vmatprep.subr.mxu0 0.0
    %122 = vmatpush1.msra.mxu0 0.0
    %123 = vmatprep.subr.mxu0 0.0
    %124 = vmatpush1.msra.mxu0 0.0
    %125 = vmatprep.subr.mxu0 0.0
    %126 = vmatpush1.msra.mxu0 0.0
    %127 = vmatprep.subr.mxu0 0.0
    %128 = vmatpush1.msra.mxu0 0.0
    %129 = vmatprep.mubr.f32.mxu0 0.0
    %130 = vmatmul.mubr.f32.gmra.mrb[0].mxu0 %v45
    %v131 = vpop.f32.mrb[0].mxu0
    %v132 = vadd.f32 0.0, %v131
    %v133 = vpop.f32.mrb[0].mxu0
    %134 = vmatprep.mubr.f32.mxu0 0.0
    %135 = vmatmul.mubr.f32.gmra.mrb[0].mxu0 %v48
    %v136 = vpop.f32.mrb[0].mxu0
    %v137 = vadd.f32 0.0, %v136
    %v138 = vpop.f32.mrb[0].mxu0
    %139 = vmatprep.mubr.f32.mxu0 0.0
    %140 = vmatmul.mubr.f32.gmra.mrb[0].mxu0 %v51
    %v141 = vpop.f32.mrb[0].mxu0
    %v142 = vadd.f32 0.0, %v141
    %v143 = vpop.f32.mrb[0].mxu0
    %144 = vmatprep.mubr.f32.mxu0 0.0
    %145 = vmatmul.mubr.f32.gmra.mrb[0].mxu0 %v54
    %v146 = vpop.f32.mrb[0].mxu0
    %v147 = vadd.f32 0.0, %v146
    %v148 = vpop.f32.mrb[0].mxu0
    %149 = vmatprep.mubr.f32.mxu0 0.0
    %150 = vmatmul.mubr.f32.gmra.mrb[0].mxu0 %v57
    %v151 = vpop.f32.mrb[0].mxu0
    %v152 = vadd.f32 0.0, %v151
    %v153 = vpop.f32.mrb[0].mxu0
    %154 = vmatprep.mubr.f32.mxu0 0.0
    %155 = vmatmul.mubr.f32.gmra.mrb[0].mxu0 %v60
    %v156 = vpop.f32.mrb[0].mxu0
    %v157 = vadd.f32 0.0, %v156
    %v158 = vpop.f32.mrb[0].mxu0
    %159 = vmatprep.mubr.f32.mxu0 0.0
    %160 = vmatmul.mubr.f32.gmra.mrb[0].mxu0 %v63
    %v161 = vpop.f32.mrb[0].mxu0
    %v162 = vadd.f32 0.0, %v161
    %v163 = vpop.f32.mrb[0].mxu0
    %164 = vdwg.mxu0
    %v165 = vmax.f32 %v132, 0.0
    %v166 = vmax.f32 %v137, 0.0
    %v167 = vmax.f32 %v142, 0.0
    %v168 = vmax.f32 %v147, 0.0
    %v169 = vmax.f32 %v152, 0.0
    %v170 = vmax.f32 %v157, 0.0
    %v171 = vmax.f32 %v162, 0.0
    %v172 = vld [vmem:[%s2] sm:$0x1]
    %v173 = vlaneseq
    %v174 = vshrl.u32 %v173, 7
    %v175 = vsub.s32 0, %v174
    %v176 = vrot.slane %v172, %v175
    %v177 = vmul.f32 %v165, %v176
    %v178 = vmul.f32 %v166, %v176
    %v179 = vmul.f32 %v167, %v176
    %v180 = vmul.f32 %v168, %v176
    %v181 = vmul.f32 %v169, %v176
    %v182 = vmul.f32 %v170, %v176
    %v183 = vmul.f32 %v171, %v176
    %v184 = vld [vmem:[%s2 + $0x1] sm:$0x1]
    %v185 = vlaneseq
    %v186 = vshrl.u32 %v185, 7
    %v187 = vsub.s32 0, %v186
    %v188 = vrot.slane %v184, %v187
    %v189 = vadd.f32 %v177, %v188
    %v190 = vadd.f32 %v178, %v188
    %v191 = vadd.f32 %v179, %v188
    %v192 = vadd.f32 %v180, %v188
    %v193 = vadd.f32 %v181, %v188
    %v194 = vadd.f32 %v182, %v188
    %v195 = vadd.f32 %v183, %v188
    %vm200 = vcmask 1045504
    %v201 = vrot.slane %v192, 2
    %v202 = vrot.slane %v193, 2
    %v203 = vsel %vm200, %v201, %v202
    %v204 = vrot.slane %v194, 2
    %v205 = vsel %vm200, %v202, %v204
    %v206 = vrot.slane %v195, 2
    %v207 = vsel %vm200, %v204, %v206
    %v212 = vmax.f32 %v189, %v203
    %v213 = vmax.f32 %v190, %v205
    %v214 = vmax.f32 %v191, %v207
    %v215 = vmax.f32 %v192, %v206
    %v217 = vrot.slane %v212, 2
    %v219 = vrot.slane %v212, 4
    %v221 = vrot.slane %v212, 6
    %v224 = vrot.slane %v213, 2
    %v226 = vrot.slane %v213, 4
    %v228 = vrot.slane %v213, 6
    %v231 = vrot.slane %v214, 2
    %v233 = vrot.slane %v214, 4
    %v235 = vrot.slane %v214, 6
    %v237 = vld [vmem:[#allocation2] sm:$0xf]
    %v238 = vld [vmem:[#allocation2 + $0x4] sm:$0xf]
    %v239 = vld [vmem:[#allocation2 + $0x8] sm:$0xf]
    %v240 = vld [vmem:[#allocation2 + $0xc] sm:$0xf]
    %v241 = vld [vmem:[#allocation2 + $0x10] sm:$0xf]
    %v242 = vld [vmem:[#allocation2 + $0x14] sm:$0xf]
    %v243 = vld [vmem:[#allocation2 + $0x18] sm:$0xf]
    %v244 = vld [vmem:[#allocation2 + $0x1c] sm:$0xf]
    %v245 = vld [vmem:[#allocation2 + $0x20] sm:$0xf]
    %v246 = vld [vmem:[#allocation2 + $0x24] sm:$0xf]
    %v247 = vld [vmem:[#allocation2 + $0x28] sm:$0xf]
    %v248 = vld [vmem:[#allocation2 + $0x2c] sm:$0xf]
    %v249 = vld [vmem:[#allocation2 + $0x30] sm:$0xf]
    %v250 = vld [vmem:[#allocation2 + $0x34] sm:$0xf]
    %v251 = vld [vmem:[#allocation2 + $0x38] sm:$0xf]
    %v252 = vld [vmem:[#allocation2 + $0x3c] sm:$0xf]
    %v253 = vld [vmem:[#allocation2 + $0x40] sm:$0xf]
    %v254 = vld [vmem:[#allocation2 + $0x44] sm:$0xf]
    %v255 = vld [vmem:[#allocation2 + $0x48] sm:$0xf]
    %v256 = vld [vmem:[#allocation2 + $0x4c] sm:$0xf]
    %v257 = vld [vmem:[#allocation2 + $0x50] sm:$0xf]
    %v258 = vld [vmem:[#allocation2 + $0x54] sm:$0xf]
    %v259 = vld [vmem:[#allocation2 + $0x58] sm:$0xf]
    %v260 = vld [vmem:[#allocation2 + $0x5c] sm:$0xf]
    %v261 = vld [vmem:[#allocation2 + $0x60] sm:$0xf]
    %v262 = vld [vmem:[#allocation2 + $0x64] sm:$0xf]
    %v263 = vld [vmem:[#allocation2 + $0x68] sm:$0xf]
    %v264 = vld [vmem:[#allocation2 + $0x6c] sm:$0xf]
    %v265 = vld [vmem:[#allocation2 + $0x70] sm:$0xf]
    %v266 = vld [vmem:[#allocation2 + $0x74] sm:$0xf]
    %v267 = vld [vmem:[#allocation2 + $0x78] sm:$0xf]
    %v268 = vld [vmem:[#allocation2 + $0x7c] sm:$0xf]
    %v269 = vld [vmem:[#allocation2 + $0x80] sm:$0xf]
    %v270 = vld [vmem:[#allocation2 + $0x84] sm:$0xf]
    %v271 = vld [vmem:[#allocation2 + $0x88] sm:$0xf]
    %v272 = vld [vmem:[#allocation2 + $0x8c] sm:$0xf]
    %v273 = vld [vmem:[#allocation2 + $0x90] sm:$0xf]
    %v274 = vld [vmem:[#allocation2 + $0x94] sm:$0xf]
    %v275 = vld [vmem:[#allocation2 + $0x98] sm:$0xf]
    %v276 = vld [vmem:[#allocation2 + $0x9c] sm:$0xf]
    %v277 = vld [vmem:[#allocation2 + $0xa0] sm:$0xf]
    %v278 = vld [vmem:[#allocation2 + $0xa4] sm:$0xf]
    %v279 = vld [vmem:[#allocation2 + $0xa8] sm:$0xf]
    %v280 = vld [vmem:[#allocation2 + $0xac] sm:$0xf]
    %v281 = vld [vmem:[#allocation2 + $0xb0] sm:$0xf]
    %v282 = vld [vmem:[#allocation2 + $0xb4] sm:$0xf]
    %v283 = vld [vmem:[#allocation2 + $0xb8] sm:$0xf]
    %v284 = vld [vmem:[#allocation2 + $0xbc] sm:$0xf]
    %v285 = vld [vmem:[#allocation2 + $0xc0] sm:$0xf]
    %v286 = vld [vmem:[#allocation2 + $0xc4] sm:$0xf]
    %v287 = vld [vmem:[#allocation2 + $0xc8] sm:$0xf]
    %v288 = vld [vmem:[#allocation2 + $0xcc] sm:$0xf]
    %v289 = vld [vmem:[#allocation2 + $0xd0] sm:$0xf]
    %v290 = vld [vmem:[#allocation2 + $0xd4] sm:$0xf]
    %v291 = vld [vmem:[#allocation2 + $0xd8] sm:$0xf]
    %v292 = vld [vmem:[#allocation2 + $0xdc] sm:$0xf]
    %v293 = vld [vmem:[#allocation2 + $0xe0] sm:$0xf]
    %v294 = vld [vmem:[#allocation2 + $0xe4] sm:$0xf]
    %v295 = vld [vmem:[#allocation2 + $0xe8] sm:$0xf]
    %v296 = vld [vmem:[#allocation2 + $0xec] sm:$0xf]
    %v297 = vld [vmem:[#allocation2 + $0xf0] sm:$0xf]
    %v298 = vld [vmem:[#allocation2 + $0xf4] sm:$0xf]
    %v299 = vld [vmem:[#allocation2 + $0xf8] sm:$0xf]
    %v300 = vld [vmem:[#allocation2 + $0xfc] sm:$0xf]
    %v301 = vld [vmem:[#allocation2 + $0x100] sm:$0xf]
    %v302 = vld [vmem:[#allocation2 + $0x104] sm:$0xf]
    %v303 = vld [vmem:[#allocation2 + $0x108] sm:$0xf]
    %v304 = vld [vmem:[#allocation2 + $0x10c] sm:$0xf]
    %v305 = vld [vmem:[#allocation2 + $0x110] sm:$0xf]
    %v306 = vld [vmem:[#allocation2 + $0x114] sm:$0xf]
    %v307 = vld [vmem:[#allocation2 + $0x118] sm:$0xf]
    %v308 = vld [vmem:[#allocation2 + $0x11c] sm:$0xf]
    %v309 = vld [vmem:[#allocation2 + $0x120] sm:$0xf]
    %v310 = vld [vmem:[#allocation2 + $0x124] sm:$0xf]
    %v311 = vld [vmem:[#allocation2 + $0x128] sm:$0xf]
    %v312 = vld [vmem:[#allocation2 + $0x12c] sm:$0xf]
    %v313 = vld [vmem:[#allocation2 + $0x130] sm:$0xf]
    %v314 = vld [vmem:[#allocation2 + $0x134] sm:$0xf]
    %v315 = vld [vmem:[#allocation2 + $0x138] sm:$0xf]
    %v316 = vld [vmem:[#allocation2 + $0x13c] sm:$0xf]
    %v317 = vld [vmem:[#allocation2 + $0x140] sm:$0xf]
    %v318 = vld [vmem:[#allocation2 + $0x144] sm:$0xf]
    %v319 = vld [vmem:[#allocation2 + $0x148] sm:$0xf]
    %v320 = vld [vmem:[#allocation2 + $0x14c] sm:$0xf]
    %v321 = vld [vmem:[#allocation2 + $0x150] sm:$0xf]
    %v322 = vld [vmem:[#allocation2 + $0x154] sm:$0xf]
    %v323 = vld [vmem:[#allocation2 + $0x158] sm:$0xf]
    %v324 = vld [vmem:[#allocation2 + $0x15c] sm:$0xf]
    %v325 = vld [vmem:[#allocation2 + $0x160] sm:$0xf]
    %v326 = vld [vmem:[#allocation2 + $0x164] sm:$0xf]
    %v327 = vld [vmem:[#allocation2 + $0x168] sm:$0xf]
    %v328 = vld [vmem:[#allocation2 + $0x16c] sm:$0xf]
    %v329 = vld [vmem:[#allocation2 + $0x170] sm:$0xf]
    %v330 = vld [vmem:[#allocation2 + $0x174] sm:$0xf]
    %v331 = vld [vmem:[#allocation2 + $0x178] sm:$0xf]
    %v332 = vld [vmem:[#allocation2 + $0x17c] sm:$0xf]
    %v333 = vld [vmem:[#allocation2 + $0x180] sm:$0xf]
    %v334 = vld [vmem:[#allocation2 + $0x184] sm:$0xf]
    %v335 = vld [vmem:[#allocation2 + $0x188] sm:$0xf]
    %v336 = vld [vmem:[#allocation2 + $0x18c] sm:$0xf]
    %v337 = vld [vmem:[#allocation2 + $0x190] sm:$0xf]
    %v338 = vld [vmem:[#allocation2 + $0x194] sm:$0xf]
    %v339 = vld [vmem:[#allocation2 + $0x198] sm:$0xf]
    %v340 = vld [vmem:[#allocation2 + $0x19c] sm:$0xf]
    %v341 = vld [vmem:[#allocation2 + $0x1a0] sm:$0xf]
    %v342 = vld [vmem:[#allocation2 + $0x1a4] sm:$0xf]
    %v343 = vld [vmem:[#allocation2 + $0x1a8] sm:$0xf]
    %v344 = vld [vmem:[#allocation2 + $0x1ac] sm:$0xf]
    %v345 = vld [vmem:[#allocation2 + $0x1b0] sm:$0xf]
    %v346 = vld [vmem:[#allocation2 + $0x1b4] sm:$0xf]
    %v347 = vld [vmem:[#allocation2 + $0x1b8] sm:$0xf]
    %v348 = vld [vmem:[#allocation2 + $0x1bc] sm:$0xf]
    %v349 = vld [vmem:[#allocation2 + $0x1c0] sm:$0xf]
    %v350 = vld [vmem:[#allocation2 + $0x1c4] sm:$0xf]
    %v351 = vld [vmem:[#allocation2 + $0x1c8] sm:$0xf]
    %v352 = vld [vmem:[#allocation2 + $0x1cc] sm:$0xf]
    %v353 = vld [vmem:[#allocation2 + $0x1d0] sm:$0xf]
    %v354 = vld [vmem:[#allocation2 + $0x1d4] sm:$0xf]
    %v355 = vld [vmem:[#allocation2 + $0x1d8] sm:$0xf]
    %v356 = vld [vmem:[#allocation2 + $0x1dc] sm:$0xf]
    %v357 = vld [vmem:[#allocation2 + $0x1e0] sm:$0xf]
    %v358 = vld [vmem:[#allocation2 + $0x1e4] sm:$0xf]
    %v359 = vld [vmem:[#allocation2 + $0x1e8] sm:$0xf]
    %v360 = vld [vmem:[#allocation2 + $0x1ec] sm:$0xf]
    %v361 = vld [vmem:[#allocation2 + $0x1f0] sm:$0xf]
    %v362 = vld [vmem:[#allocation2 + $0x1f4] sm:$0xf]
    %v363 = vld [vmem:[#allocation2 + $0x1f8] sm:$0xf]
    %v364 = vld [vmem:[#allocation2 + $0x1fc] sm:$0xf]
    %v365 = vld [vmem:[#allocation2 + $0x200] sm:$0xf]
    %v366 = vld [vmem:[#allocation2 + $0x204] sm:$0xf]
    %v367 = vld [vmem:[#allocation2 + $0x208] sm:$0xf]
    %v368 = vld [vmem:[#allocation2 + $0x20c] sm:$0xf]
    %v369 = vld [vmem:[#allocation2 + $0x210] sm:$0xf]
    %v370 = vld [vmem:[#allocation2 + $0x214] sm:$0xf]
    %v371 = vld [vmem:[#allocation2 + $0x218] sm:$0xf]
    %v372 = vld [vmem:[#allocation2 + $0x21c] sm:$0xf]
    %v373 = vld [vmem:[#allocation2 + $0x220] sm:$0xf]
    %v374 = vld [vmem:[#allocation2 + $0x224] sm:$0xf]
    %v375 = vld [vmem:[#allocation2 + $0x228] sm:$0xf]
    %v376 = vld [vmem:[#allocation2 + $0x22c] sm:$0xf]
    %v377 = vld [vmem:[#allocation2 + $0x230] sm:$0xf]
    %v378 = vld [vmem:[#allocation2 + $0x234] sm:$0xf]
    %v379 = vld [vmem:[#allocation2 + $0x238] sm:$0xf]
    %v380 = vld [vmem:[#allocation2 + $0x23c] sm:$0xf]
    %v381 = vld [vmem:[#allocation2 + $0x240] sm:$0xf]
    %v382 = vld [vmem:[#allocation2 + $0x244] sm:$0xf]
    %v383 = vld [vmem:[#allocation2 + $0x248] sm:$0xf]
    %v384 = vld [vmem:[#allocation2 + $0x24c] sm:$0xf]
    %v385 = vld [vmem:[#allocation2 + $0x250] sm:$0xf]
    %v386 = vld [vmem:[#allocation2 + $0x254] sm:$0xf]
    %v387 = vld [vmem:[#allocation2 + $0x258] sm:$0xf]
    %v388 = vld [vmem:[#allocation2 + $0x25c] sm:$0xf]
    %v389 = vld [vmem:[#allocation2 + $0x260] sm:$0xf]
    %v390 = vld [vmem:[#allocation2 + $0x264] sm:$0xf]
    %v391 = vld [vmem:[#allocation2 + $0x268] sm:$0xf]
    %v392 = vld [vmem:[#allocation2 + $0x26c] sm:$0xf]
    %v393 = vld [vmem:[#allocation2 + $0x270] sm:$0xf]
    %v394 = vld [vmem:[#allocation2 + $0x274] sm:$0xf]
    %v395 = vld [vmem:[#allocation2 + $0x278] sm:$0xf]
    %v396 = vld [vmem:[#allocation2 + $0x27c] sm:$0xf]
    %v397 = vld [vmem:[#allocation2 + $0x280] sm:$0xf]
    %v398 = vld [vmem:[#allocation2 + $0x284] sm:$0xf]
    %v399 = vld [vmem:[#allocation2 + $0x288] sm:$0xf]
    %v400 = vld [vmem:[#allocation2 + $0x28c] sm:$0xf]
    %v401 = vld [vmem:[#allocation2 + $0x290] sm:$0xf]
    %v402 = vld [vmem:[#allocation2 + $0x294] sm:$0xf]
    %v403 = vld [vmem:[#allocation2 + $0x298] sm:$0xf]
    %v404 = vld [vmem:[#allocation2 + $0x29c] sm:$0xf]
    %v405 = vld [vmem:[#allocation2 + $0x2a0] sm:$0xf]
    %v406 = vld [vmem:[#allocation2 + $0x2a4] sm:$0xf]
    %v407 = vld [vmem:[#allocation2 + $0x2a8] sm:$0xf]
    %v408 = vld [vmem:[#allocation2 + $0x2ac] sm:$0xf]
    %v409 = vld [vmem:[#allocation2 + $0x2b0] sm:$0xf]
    %v410 = vld [vmem:[#allocation2 + $0x2b4] sm:$0xf]
    %v411 = vld [vmem:[#allocation2 + $0x2b8] sm:$0xf]
    %v412 = vld [vmem:[#allocation2 + $0x2bc] sm:$0xf]
    %v413 = vld [vmem:[#allocation2 + $0x2c0] sm:$0xf]
    %v414 = vld [vmem:[#allocation2 + $0x2c4] sm:$0xf]
    %v415 = vld [vmem:[#allocation2 + $0x2c8] sm:$0xf]
    %v416 = vld [vmem:[#allocation2 + $0x2cc] sm:$0xf]
    %v417 = vld [vmem:[#allocation2 + $0x2d0] sm:$0xf]
    %v418 = vld [vmem:[#allocation2 + $0x2d4] sm:$0xf]
    %v419 = vld [vmem:[#allocation2 + $0x2d8] sm:$0xf]
    %v420 = vld [vmem:[#allocation2 + $0x2dc] sm:$0xf]
    %v421 = vld [vmem:[#allocation2 + $0x2e0] sm:$0xf]
    %v422 = vld [vmem:[#allocation2 + $0x2e4] sm:$0xf]
    %v423 = vld [vmem:[#allocation2 + $0x2e8] sm:$0xf]
    %v424 = vld [vmem:[#allocation2 + $0x2ec] sm:$0xf]
    %v425 = vld [vmem:[#allocation2 + $0x2f0] sm:$0xf]
    %v426 = vld [vmem:[#allocation2 + $0x2f4] sm:$0xf]
    %v427 = vld [vmem:[#allocation2 + $0x2f8] sm:$0xf]
    %v428 = vld [vmem:[#allocation2 + $0x2fc] sm:$0xf]
    %v429 = vld [vmem:[#allocation2 + $0x300] sm:$0xf]
    %v430 = vld [vmem:[#allocation2 + $0x304] sm:$0xf]
    %v431 = vld [vmem:[#allocation2 + $0x308] sm:$0xf]
    %v432 = vld [vmem:[#allocation2 + $0x30c] sm:$0xf]
    %v433 = vld [vmem:[#allocation2 + $0x310] sm:$0xf]
    %v434 = vld [vmem:[#allocation2 + $0x314] sm:$0xf]
    %v435 = vld [vmem:[#allocation2 + $0x318] sm:$0xf]
    %v436 = vld [vmem:[#allocation2 + $0x31c] sm:$0xf]
    %v437 = vld [vmem:[#allocation2 + $0x320] sm:$0xf]
    %v438 = vld [vmem:[#allocation2 + $0x324] sm:$0xf]
    %v439 = vld [vmem:[#allocation2 + $0x328] sm:$0xf]
    %v440 = vld [vmem:[#allocation2 + $0x32c] sm:$0xf]
    %v441 = vld [vmem:[#allocation2 + $0x330] sm:$0xf]
    %v442 = vld [vmem:[#allocation2 + $0x334] sm:$0xf]
    %v443 = vld [vmem:[#allocation2 + $0x338] sm:$0xf]
    %v444 = vld [vmem:[#allocation2 + $0x33c] sm:$0xf]
    %v445 = vunpack.c.l.bf16 %v237
    %v446 = vunpack.c.l.bf16 %v238
    %v447 = vunpack.c.l.bf16 %v239
    %v448 = vunpack.c.l.bf16 %v240
    %v449 = vunpack.c.l.bf16 %v241
    %v450 = vunpack.c.l.bf16 %v242
    %v451 = vunpack.c.l.bf16 %v243
    %v452 = vunpack.c.l.bf16 %v244
    %v453 = vunpack.c.l.bf16 %v245
    %v454 = vunpack.c.l.bf16 %v246
    %v455 = vunpack.c.l.bf16 %v247
    %v456 = vunpack.c.l.bf16 %v248
    %v457 = vunpack.c.l.bf16 %v249
    %v458 = vunpack.c.l.bf16 %v250
    %v459 = vunpack.c.l.bf16 %v251
    %v460 = vunpack.c.l.bf16 %v252
    %v461 = vunpack.c.l.bf16 %v253
    %v462 = vunpack.c.l.bf16 %v254
    %v463 = vunpack.c.l.bf16 %v255
    %v464 = vunpack.c.l.bf16 %v256
    %v465 = vunpack.c.l.bf16 %v257
    %v466 = vunpack.c.l.bf16 %v258
    %v467 = vunpack.c.l.bf16 %v259
    %v468 = vunpack.c.l.bf16 %v260
    %v469 = vunpack.c.l.bf16 %v261
    %v470 = vunpack.c.l.bf16 %v262
    %v471 = vunpack.c.l.bf16 %v263
    %v472 = vunpack.c.l.bf16 %v264
    %v473 = vunpack.c.l.bf16 %v265
    %v474 = vunpack.c.l.bf16 %v266
    %v475 = vunpack.c.l.bf16 %v267
    %v476 = vunpack.c.l.bf16 %v268
    %v477 = vunpack.c.l.bf16 %v269
    %v478 = vunpack.c.l.bf16 %v270
    %v479 = vunpack.c.l.bf16 %v271
    %v480 = vunpack.c.l.bf16 %v272
    %v481 = vunpack.c.l.bf16 %v273
    %v482 = vunpack.c.l.bf16 %v274
    %v483 = vunpack.c.l.bf16 %v275
    %v484 = vunpack.c.l.bf16 %v276
    %v485 = vunpack.c.l.bf16 %v277
    %v486 = vunpack.c.l.bf16 %v278
    %v487 = vunpack.c.l.bf16 %v279
    %v488 = vunpack.c.l.bf16 %v280
    %v489 = vunpack.c.l.bf16 %v281
    %v490 = vunpack.c.l.bf16 %v282
    %v491 = vunpack.c.l.bf16 %v283
    %v492 = vunpack.c.l.bf16 %v284
    %v493 = vunpack.c.l.bf16 %v285
    %v494 = vunpack.c.l.bf16 %v286
    %v495 = vunpack.c.l.bf16 %v287
    %v496 = vunpack.c.l.bf16 %v288
    %v497 = vunpack.c.l.bf16 %v289
    %v498 = vunpack.c.l.bf16 %v290
    %v499 = vunpack.c.l.bf16 %v291
    %v500 = vunpack.c.l.bf16 %v292
    %v501 = vunpack.c.l.bf16 %v293
    %v502 = vunpack.c.l.bf16 %v294
    %v503 = vunpack.c.l.bf16 %v295
    %v504 = vunpack.c.l.bf16 %v296
    %v505 = vunpack.c.l.bf16 %v297
    %v506 = vunpack.c.l.bf16 %v298
    %v507 = vunpack.c.l.bf16 %v299
    %v508 = vunpack.c.l.bf16 %v300
    %v509 = vunpack.c.l.bf16 %v301
    %v510 = vunpack.c.l.bf16 %v302
    %v511 = vunpack.c.l.bf16 %v303
    %v512 = vunpack.c.l.bf16 %v304
    %v513 = vunpack.c.l.bf16 %v305
    %v514 = vunpack.c.l.bf16 %v306
    %v515 = vunpack.c.l.bf16 %v307
    %v516 = vunpack.c.l.bf16 %v308
    %v517 = vunpack.c.l.bf16 %v309
    %v518 = vunpack.c.l.bf16 %v310
    %v519 = vunpack.c.l.bf16 %v311
    %v520 = vunpack.c.l.bf16 %v312
    %v521 = vunpack.c.l.bf16 %v313
    %v522 = vunpack.c.l.bf16 %v314
    %v523 = vunpack.c.l.bf16 %v315
    %v524 = vunpack.c.l.bf16 %v316
    %v525 = vunpack.c.l.bf16 %v317
    %v526 = vunpack.c.l.bf16 %v318
    %v527 = vunpack.c.l.bf16 %v319
    %v528 = vunpack.c.l.bf16 %v320
    %v529 = vunpack.c.l.bf16 %v321
    %v530 = vunpack.c.l.bf16 %v322
    %v531 = vunpack.c.l.bf16 %v323
    %v532 = vunpack.c.l.bf16 %v324
    %v533 = vunpack.c.l.bf16 %v325
    %v534 = vunpack.c.l.bf16 %v326
    %v535 = vunpack.c.l.bf16 %v327
    %v536 = vunpack.c.l.bf16 %v328
    %v537 = vunpack.c.l.bf16 %v329
    %v538 = vunpack.c.l.bf16 %v330
    %v539 = vunpack.c.l.bf16 %v331
    %v540 = vunpack.c.l.bf16 %v332
    %v541 = vunpack.c.l.bf16 %v333
    %v542 = vunpack.c.l.bf16 %v334
    %v543 = vunpack.c.l.bf16 %v335
    %v544 = vunpack.c.l.bf16 %v336
    %v545 = vunpack.c.l.bf16 %v337
    %v546 = vunpack.c.l.bf16 %v338
    %v547 = vunpack.c.l.bf16 %v339
    %v548 = vunpack.c.l.bf16 %v340
    %v549 = vunpack.c.l.bf16 %v341
    %v550 = vunpack.c.l.bf16 %v342
    %v551 = vunpack.c.l.bf16 %v343
    %v552 = vunpack.c.l.bf16 %v344
    %v553 = vunpack.c.l.bf16 %v345
    %v554 = vunpack.c.l.bf16 %v346
    %v555 = vunpack.c.l.bf16 %v347
    %v556 = vunpack.c.l.bf16 %v348
    %v557 = vunpack.c.l.bf16 %v349
    %v558 = vunpack.c.l.bf16 %v350
    %v559 = vunpack.c.l.bf16 %v351
    %v560 = vunpack.c.l.bf16 %v352
    %v561 = vunpack.c.l.bf16 %v353
    %v562 = vunpack.c.l.bf16 %v354
    %v563 = vunpack.c.l.bf16 %v355
    %v564 = vunpack.c.l.bf16 %v356
    %v565 = vunpack.c.l.bf16 %v357
    %v566 = vunpack.c.l.bf16 %v358
    %v567 = vunpack.c.l.bf16 %v359
    %v568 = vunpack.c.l.bf16 %v360
    %v569 = vunpack.c.l.bf16 %v361
    %v570 = vunpack.c.l.bf16 %v362
    %v571 = vunpack.c.l.bf16 %v363
    %v572 = vunpack.c.l.bf16 %v364
    %v573 = vunpack.c.l.bf16 %v365
    %v574 = vunpack.c.l.bf16 %v366
    %v575 = vunpack.c.l.bf16 %v367
    %v576 = vunpack.c.l.bf16 %v368
    %v577 = vunpack.c.l.bf16 %v369
    %v578 = vunpack.c.l.bf16 %v370
    %v579 = vunpack.c.l.bf16 %v371
    %v580 = vunpack.c.l.bf16 %v372
    %v581 = vunpack.c.l.bf16 %v373
    %v582 = vunpack.c.l.bf16 %v374
    %v583 = vunpack.c.l.bf16 %v375
    %v584 = vunpack.c.l.bf16 %v376
    %v585 = vunpack.c.l.bf16 %v377
    %v586 = vunpack.c.l.bf16 %v378
    %v587 = vunpack.c.l.bf16 %v379
    %v588 = vunpack.c.l.bf16 %v380
    %v589 = vunpack.c.l.bf16 %v381
    %v590 = vunpack.c.l.bf16 %v382
    %v591 = vunpack.c.l.bf16 %v383
    %v592 = vunpack.c.l.bf16 %v384
    %v593 = vunpack.c.l.bf16 %v385
    %v594 = vunpack.c.l.bf16 %v386
    %v595 = vunpack.c.l.bf16 %v387
    %v596 = vunpack.c.l.bf16 %v388
    %v597 = vunpack.c.l.bf16 %v389
    %v598 = vunpack.c.l.bf16 %v390
    %v599 = vunpack.c.l.bf16 %v391
    %v600 = vunpack.c.l.bf16 %v392
    %v601 = vunpack.c.l.bf16 %v393
    %v602 = vunpack.c.l.bf16 %v394
    %v603 = vunpack.c.l.bf16 %v395
    %v604 = vunpack.c.l.bf16 %v396
    %v605 = vunpack.c.l.bf16 %v397
    %v606 = vunpack.c.l.bf16 %v398
    %v607 = vunpack.c.l.bf16 %v399
    %v608 = vunpack.c.l.bf16 %v400
    %v609 = vunpack.c.l.bf16 %v401
    %v610 = vunpack.c.l.bf16 %v402
    %v611 = vunpack.c.l.bf16 %v403
    %v612 = vunpack.c.l.bf16 %v404
    %v613 = vunpack.c.l.bf16 %v405
    %v614 = vunpack.c.l.bf16 %v406
    %v615 = vunpack.c.l.bf16 %v407
    %v616 = vunpack.c.l.bf16 %v408
    %v617 = vunpack.c.l.bf16 %v409
    %v618 = vunpack.c.l.bf16 %v410
    %v619 = vunpack.c.l.bf16 %v411
    %v620 = vunpack.c.l.bf16 %v412
    %v621 = vunpack.c.l.bf16 %v413
    %v622 = vunpack.c.l.bf16 %v414
    %v623 = vunpack.c.l.bf16 %v415
    %v624 = vunpack.c.l.bf16 %v416
    %v625 = vunpack.c.l.bf16 %v417
    %v626 = vunpack.c.l.bf16 %v418
    %v627 = vunpack.c.l.bf16 %v419
    %v628 = vunpack.c.l.bf16 %v420
    %v629 = vunpack.c.l.bf16 %v421
    %v630 = vunpack.c.l.bf16 %v422
    %v631 = vunpack.c.l.bf16 %v423
    %v632 = vunpack.c.l.bf16 %v424
    %v633 = vunpack.c.l.bf16 %v425
    %v634 = vunpack.c.l.bf16 %v426
    %v635 = vunpack.c.l.bf16 %v427
    %v636 = vunpack.c.l.bf16 %v428
    %v637 = vunpack.c.l.bf16 %v429
    %v638 = vunpack.c.l.bf16 %v430
    %v639 = vunpack.c.l.bf16 %v431
    %v640 = vunpack.c.l.bf16 %v432
    %v641 = vunpack.c.l.bf16 %v433
    %v642 = vunpack.c.l.bf16 %v434
    %v643 = vunpack.c.l.bf16 %v435
    %v644 = vunpack.c.l.bf16 %v436
    %v645 = vunpack.c.l.bf16 %v437
    %v646 = vunpack.c.l.bf16 %v438
    %v647 = vunpack.c.l.bf16 %v439
    %v648 = vunpack.c.l.bf16 %v440
    %v649 = vunpack.c.l.bf16 %v441
    %v650 = vunpack.c.l.bf16 %v442
    %v651 = vunpack.c.l.bf16 %v443
    %v652 = vunpack.c.l.bf16 %v444
    %v653 = vld [vmem:[%s2 + $0x2] sm:$0x1]
    %v654 = vlaneseq
    %v655 = vshrl.u32 %v654, 7
    %v656 = vsub.s32 0, %v655
    %v657 = vrot.slane %v653, %v656
    %658 = vmatprep.subr.mxu0 0.0
    %659 = vmatpush1.msra.mxu0 %v445
    %660 = vmatprep.subr.mxu0 0.0
    %661 = vmatpush1.msra.mxu0 %v446
    %662 = vmatprep.subr.mxu0 0.0
    %663 = vmatpush1.msra.mxu0 %v447
    %664 = vmatprep.subr.mxu0 0.0
    %665 = vmatpush1.msra.mxu0 %v448
    %666 = vmatprep.subr.mxu0 0.0
    %667 = vmatpush1.msra.mxu0 %v449
    %668 = vmatprep.subr.mxu0 0.0
    %669 = vmatpush1.msra.mxu0 %v450
    %670 = vmatprep.subr.mxu0 0.0
    %671 = vmatpush1.msra.mxu0 %v451
    %672 = vmatprep.subr.mxu0 0.0
    %673 = vmatpush1.msra.mxu0 %v452
    %674 = vmatprep.subr.mxu0 0.0
    %675 = vmatpush1.msra.mxu0 %v453
    %676 = vmatprep.subr.mxu0 0.0
    %677 = vmatpush1.msra.mxu0 %v454
    %678 = vmatprep.subr.mxu0 0.0
    %679 = vmatpush1.msra.mxu0 %v455
    %680 = vmatprep.subr.mxu0 0.0
    %681 = vmatpush1.msra.mxu0 %v456
    %682 = vmatprep.subr.mxu0 0.0
    %683 = vmatpush1.msra.mxu0 %v457
    %684 = vmatprep.subr.mxu0 0.0
    %685 = vmatpush1.msra.mxu0 %v458
    %686 = vmatprep.subr.mxu0 0.0
    %687 = vmatpush1.msra.mxu0 %v459
    %688 = vmatprep.subr.mxu0 0.0
    %689 = vmatpush1.msra.mxu0 %v460
    %690 = vmatprep.subr.mxu0 0.0
    %691 = vmatpush1.msra.mxu0 %v461
    %692 = vmatprep.subr.mxu0 0.0
    %693 = vmatpush1.msra.mxu0 %v462
    %694 = vmatprep.subr.mxu0 0.0
    %695 = vmatpush1.msra.mxu0 %v463
    %696 = vmatprep.subr.mxu0 0.0
    %697 = vmatpush1.msra.mxu0 %v464
    %698 = vmatprep.subr.mxu0 0.0
    %699 = vmatpush1.msra.mxu0 %v465
    %700 = vmatprep.subr.mxu0 0.0
    %701 = vmatpush1.msra.mxu0 %v466
    %702 = vmatprep.subr.mxu0 0.0
    %703 = vmatpush1.msra.mxu0 %v467
    %704 = vmatprep.subr.mxu0 0.0
    %705 = vmatpush1.msra.mxu0 %v468
    %706 = vmatprep.subr.mxu0 0.0
    %707 = vmatpush1.msra.mxu0 %v469
    %708 = vmatprep.subr.mxu0 0.0
    %709 = vmatpush1.msra.mxu0 %v470
    %710 = vmatprep.subr.mxu0 0.0
    %711 = vmatpush1.msra.mxu0 %v471
    %712 = vmatprep.subr.mxu0 0.0
    %713 = vmatpush1.msra.mxu0 %v472
    %714 = vmatprep.subr.mxu0 0.0
    %715 = vmatpush1.msra.mxu0 %v473
    %716 = vmatprep.subr.mxu0 0.0
    %717 = vmatpush1.msra.mxu0 %v474
    %718 = vmatprep.subr.mxu0 0.0
    %719 = vmatpush1.msra.mxu0 %v475
    %720 = vmatprep.subr.mxu0 0.0
    %721 = vmatpush1.msra.mxu0 %v476
    %722 = vmatprep.mubr.f32.mxu0 %v217
    %723 = vmatmul.mubr.f32.gmra.mrb[0].mxu0 %v212
    %v724 = vpop.f32.mrb[0].mxu0
    %v725 = vadd.f32 %v657, %v724
    %v726 = vpop.f32.mrb[0].mxu0
    %727 = vdwg.mxu0
    %728 = vmatprep.subr.mxu0 0.0
    %729 = vmatpush1.msra.mxu0 %v477
    %730 = vmatprep.subr.mxu0 0.0
    %731 = vmatpush1.msra.mxu0 %v478
    %732 = vmatprep.subr.mxu0 0.0
    %733 = vmatpush1.msra.mxu0 %v479
    %734 = vmatprep.subr.mxu0 0.0
    %735 = vmatpush1.msra.mxu0 %v480
    %736 = vmatprep.subr.mxu0 0.0
    %737 = vmatpush1.msra.mxu0 %v481
    %738 = vmatprep.subr.mxu0 0.0
    %739 = vmatpush1.msra.mxu0 %v482
    %740 = vmatprep.subr.mxu0 0.0
    %741 = vmatpush1.msra.mxu0 %v483
    %742 = vmatprep.subr.mxu0 0.0
    %743 = vmatpush1.msra.mxu0 %v484
    %744 = vmatprep.subr.mxu0 0.0
    %745 = vmatpush1.msra.mxu0 %v485
    %746 = vmatprep.subr.mxu0 0.0
    %747 = vmatpush1.msra.mxu0 %v486
    %748 = vmatprep.subr.mxu0 0.0
    %749 = vmatpush1.msra.mxu0 %v487
    %750 = vmatprep.subr.mxu0 0.0
    %751 = vmatpush1.msra.mxu0 %v488
    %752 = vmatprep.subr.mxu0 0.0
    %753 = vmatpush1.msra.mxu0 %v489
    %754 = vmatprep.subr.mxu0 0.0
    %755 = vmatpush1.msra.mxu0 %v490
    %756 = vmatprep.subr.mxu0 0.0
    %757 = vmatpush1.msra.mxu0 %v491
    %758 = vmatprep.subr.mxu0 0.0
    %759 = vmatpush1.msra.mxu0 %v492
    %760 = vmatprep.subr.mxu0 0.0
    %761 = vmatpush1.msra.mxu0 %v493
    %762 = vmatprep.subr.mxu0 0.0
    %763 = vmatpush1.msra.mxu0 %v494
    %764 = vmatprep.subr.mxu0 0.0
    %765 = vmatpush1.msra.mxu0 %v495
    %766 = vmatprep.subr.mxu0 0.0
    %767 = vmatpush1.msra.mxu0 %v496
    %768 = vmatprep.subr.mxu0 0.0
    %769 = vmatpush1.msra.mxu0 %v497
    %770 = vmatprep.subr.mxu0 0.0
    %771 = vmatpush1.msra.mxu0 %v498
    %772 = vmatprep.subr.mxu0 0.0
    %773 = vmatpush1.msra.mxu0 %v499
    %774 = vmatprep.subr.mxu0 0.0
    %775 = vmatpush1.msra.mxu0 %v500
    %776 = vmatprep.subr.mxu0 0.0
    %777 = vmatpush1.msra.mxu0 %v501
    %778 = vmatprep.subr.mxu0 0.0
    %779 = vmatpush1.msra.mxu0 %v502
    %780 = vmatprep.subr.mxu0 0.0
    %781 = vmatpush1.msra.mxu0 %v503
    %782 = vmatprep.subr.mxu0 0.0
    %783 = vmatpush1.msra.mxu0 %v504
    %784 = vmatprep.subr.mxu0 0.0
    %785 = vmatpush1.msra.mxu0 %v505
    %786 = vmatprep.subr.mxu0 0.0
    %787 = vmatpush1.msra.mxu0 %v506
    %788 = vmatprep.subr.mxu0 0.0
    %789 = vmatpush1.msra.mxu0 %v507
    %790 = vmatprep.subr.mxu0 0.0
    %791 = vmatpush1.msra.mxu0 %v508
    %792 = vmatprep.mubr.f32.mxu0 %v221
    %793 = vmatmul.mubr.f32.gmra.mrb[0].mxu0 %v219
    %v794 = vpop.f32.mrb[0].mxu0
    %v795 = vadd.f32 %v725, %v794
    %v796 = vpop.f32.mrb[0].mxu0
    %797 = vdwg.mxu0
    %798 = vmatprep.subr.mxu0 0.0
    %799 = vmatpush1.msra.mxu0 %v509
    %800 = vmatprep.subr.mxu0 0.0
    %801 = vmatpush1.msra.mxu0 %v510
    %802 = vmatprep.subr.mxu0 0.0
    %803 = vmatpush1.msra.mxu0 %v511
    %804 = vmatprep.subr.mxu0 0.0
    %805 = vmatpush1.msra.mxu0 %v512
    %806 = vmatprep.subr.mxu0 0.0
    %807 = vmatpush1.msra.mxu0 %v513
    %808 = vmatprep.subr.mxu0 0.0
    %809 = vmatpush1.msra.mxu0 %v514
    %810 = vmatprep.subr.mxu0 0.0
    %811 = vmatpush1.msra.mxu0 %v515
    %812 = vmatprep.subr.mxu0 0.0
    %813 = vmatpush1.msra.mxu0 %v516
    %814 = vmatprep.subr.mxu0 0.0
    %815 = vmatpush1.msra.mxu0 %v517
    %816 = vmatprep.subr.mxu0 0.0
    %817 = vmatpush1.msra.mxu0 %v518
    %818 = vmatprep.subr.mxu0 0.0
    %819 = vmatpush1.msra.mxu0 %v519
    %820 = vmatprep.subr.mxu0 0.0
    %821 = vmatpush1.msra.mxu0 %v520
    %822 = vmatprep.subr.mxu0 0.0
    %823 = vmatpush1.msra.mxu0 %v521
    %824 = vmatprep.subr.mxu0 0.0
    %825 = vmatpush1.msra.mxu0 %v522
    %826 = vmatprep.subr.mxu0 0.0
    %827 = vmatpush1.msra.mxu0 %v523
    %828 = vmatprep.subr.mxu0 0.0
    %829 = vmatpush1.msra.mxu0 %v524
    %830 = vmatprep.subr.mxu0 0.0
    %831 = vmatpush1.msra.mxu0 %v525
    %832 = vmatprep.subr.mxu0 0.0
    %833 = vmatpush1.msra.mxu0 %v526
    %834 = vmatprep.subr.mxu0 0.0
    %835 = vmatpush1.msra.mxu0 %v527
    %836 = vmatprep.subr.mxu0 0.0
    %837 = vmatpush1.msra.mxu0 %v528
    %838 = vmatprep.subr.mxu0 0.0
    %839 = vmatpush1.msra.mxu0 %v529
    %840 = vmatprep.subr.mxu0 0.0
    %841 = vmatpush1.msra.mxu0 %v530
    %842 = vmatprep.subr.mxu0 0.0
    %843 = vmatpush1.msra.mxu0 %v531
    %844 = vmatprep.subr.mxu0 0.0
    %845 = vmatpush1.msra.mxu0 %v532
    %846 = vmatprep.subr.mxu0 0.0
    %847 = vmatpush1.msra.mxu0 %v533
    %848 = vmatprep.subr.mxu0 0.0
    %849 = vmatpush1.msra.mxu0 %v534
    %850 = vmatprep.subr.mxu0 0.0
    %851 = vmatpush1.msra.mxu0 %v535
    %852 = vmatprep.subr.mxu0 0.0
    %853 = vmatpush1.msra.mxu0 %v536
    %854 = vmatprep.subr.mxu0 0.0
    %855 = vmatpush1.msra.mxu0 %v537
    %856 = vmatprep.subr.mxu0 0.0
    %857 = vmatpush1.msra.mxu0 %v538
    %858 = vmatprep.subr.mxu0 0.0
    %859 = vmatpush1.msra.mxu0 %v539
    %860 = vmatprep.subr.mxu0 0.0
    %861 = vmatpush1.msra.mxu0 %v540
    %862 = vmatprep.mubr.f32.mxu0 %v224
    %863 = vmatmul.mubr.f32.gmra.mrb[0].mxu0 %v213
    %v864 = vpop.f32.mrb[0].mxu0
    %v865 = vadd.f32 %v795, %v864
    %v866 = vpop.f32.mrb[0].mxu0
    %867 = vdwg.mxu0
    %868 = vmatprep.subr.mxu0 0.0
    %869 = vmatpush1.msra.mxu0 %v541
    %870 = vmatprep.subr.mxu0 0.0
    %871 = vmatpush1.msra.mxu0 %v542
    %872 = vmatprep.subr.mxu0 0.0
    %873 = vmatpush1.msra.mxu0 %v543
    %874 = vmatprep.subr.mxu0 0.0
    %875 = vmatpush1.msra.mxu0 %v544
    %876 = vmatprep.subr.mxu0 0.0
    %877 = vmatpush1.msra.mxu0 %v545
    %878 = vmatprep.subr.mxu0 0.0
    %879 = vmatpush1.msra.mxu0 %v546
    %880 = vmatprep.subr.mxu0 0.0
    %881 = vmatpush1.msra.mxu0 %v547
    %882 = vmatprep.subr.mxu0 0.0
    %883 = vmatpush1.msra.mxu0 %v548
    %884 = vmatprep.subr.mxu0 0.0
    %885 = vmatpush1.msra.mxu0 %v549
    %886 = vmatprep.subr.mxu0 0.0
    %887 = vmatpush1.msra.mxu0 %v550
    %888 = vmatprep.subr.mxu0 0.0
    %889 = vmatpush1.msra.mxu0 %v551
    %890 = vmatprep.subr.mxu0 0.0
    %891 = vmatpush1.msra.mxu0 %v552
    %892 = vmatprep.subr.mxu0 0.0
    %893 = vmatpush1.msra.mxu0 %v553
    %894 = vmatprep.subr.mxu0 0.0
    %895 = vmatpush1.msra.mxu0 %v554
    %896 = vmatprep.subr.mxu0 0.0
    %897 = vmatpush1.msra.mxu0 %v555
    %898 = vmatprep.subr.mxu0 0.0
    %899 = vmatpush1.msra.mxu0 %v556
    %900 = vmatprep.subr.mxu0 0.0
    %901 = vmatpush1.msra.mxu0 %v557
    %902 = vmatprep.subr.mxu0 0.0
    %903 = vmatpush1.msra.mxu0 %v558
    %904 = vmatprep.subr.mxu0 0.0
    %905 = vmatpush1.msra.mxu0 %v559
    %906 = vmatprep.subr.mxu0 0.0
    %907 = vmatpush1.msra.mxu0 %v560
    %908 = vmatprep.subr.mxu0 0.0
    %909 = vmatpush1.msra.mxu0 %v561
    %910 = vmatprep.subr.mxu0 0.0
    %911 = vmatpush1.msra.mxu0 %v562
    %912 = vmatprep.subr.mxu0 0.0
    %913 = vmatpush1.msra.mxu0 %v563
    %914 = vmatprep.subr.mxu0 0.0
    %915 = vmatpush1.msra.mxu0 %v564
    %916 = vmatprep.subr.mxu0 0.0
    %917 = vmatpush1.msra.mxu0 %v565
    %918 = vmatprep.subr.mxu0 0.0
    %919 = vmatpush1.msra.mxu0 %v566
    %920 = vmatprep.subr.mxu0 0.0
    %921 = vmatpush1.msra.mxu0 %v567
    %922 = vmatprep.subr.mxu0 0.0
    %923 = vmatpush1.msra.mxu0 %v568
    %924 = vmatprep.subr.mxu0 0.0
    %925 = vmatpush1.msra.mxu0 %v569
    %926 = vmatprep.subr.mxu0 0.0
    %927 = vmatpush1.msra.mxu0 %v570
    %928 = vmatprep.subr.mxu0 0.0
    %929 = vmatpush1.msra.mxu0 %v571
    %930 = vmatprep.subr.mxu0 0.0
    %931 = vmatpush1.msra.mxu0 %v572
    %932 = vmatprep.mubr.f32.mxu0 %v228
    %933 = vmatmul.mubr.f32.gmra.mrb[0].mxu0 %v226
    %v934 = vpop.f32.mrb[0].mxu0
    %v935 = vadd.f32 %v865, %v934
    %v936 = vpop.f32.mrb[0].mxu0
    %937 = vdwg.mxu0
    %938 = vmatprep.subr.mxu0 0.0
    %939 = vmatpush1.msra.mxu0 %v573
    %940 = vmatprep.subr.mxu0 0.0
    %941 = vmatpush1.msra.mxu0 %v574
    %942 = vmatprep.subr.mxu0 0.0
    %943 = vmatpush1.msra.mxu0 %v575
    %944 = vmatprep.subr.mxu0 0.0
    %945 = vmatpush1.msra.mxu0 %v576
    %946 = vmatprep.subr.mxu0 0.0
    %947 = vmatpush1.msra.mxu0 %v577
    %948 = vmatprep.subr.mxu0 0.0
    %949 = vmatpush1.msra.mxu0 %v578
    %950 = vmatprep.subr.mxu0 0.0
    %951 = vmatpush1.msra.mxu0 %v579
    %952 = vmatprep.subr.mxu0 0.0
    %953 = vmatpush1.msra.mxu0 %v580
    %954 = vmatprep.subr.mxu0 0.0
    %955 = vmatpush1.msra.mxu0 %v581
    %956 = vmatprep.subr.mxu0 0.0
    %957 = vmatpush1.msra.mxu0 %v582
    %958 = vmatprep.subr.mxu0 0.0
    %959 = vmatpush1.msra.mxu0 %v583
    %960 = vmatprep.subr.mxu0 0.0
    %961 = vmatpush1.msra.mxu0 %v584
    %962 = vmatprep.subr.mxu0 0.0
    %963 = vmatpush1.msra.mxu0 %v585
    %964 = vmatprep.subr.mxu0 0.0
    %965 = vmatpush1.msra.mxu0 %v586
    %966 = vmatprep.subr.mxu0 0.0
    %967 = vmatpush1.msra.mxu0 %v587
    %968 = vmatprep.subr.mxu0 0.0
    %969 = vmatpush1.msra.mxu0 %v588
    %970 = vmatprep.subr.mxu0 0.0
    %971 = vmatpush1.msra.mxu0 %v589
    %972 = vmatprep.subr.mxu0 0.0
    %973 = vmatpush1.msra.mxu0 %v590
    %974 = vmatprep.subr.mxu0 0.0
    %975 = vmatpush1.msra.mxu0 %v591
    %976 = vmatprep.subr.mxu0 0.0
    %977 = vmatpush1.msra.mxu0 %v592
    %978 = vmatprep.subr.mxu0 0.0
    %979 = vmatpush1.msra.mxu0 %v593
    %980 = vmatprep.subr.mxu0 0.0
    %981 = vmatpush1.msra.mxu0 %v594
    %982 = vmatprep.subr.mxu0 0.0
    %983 = vmatpush1.msra.mxu0 %v595
    %984 = vmatprep.subr.mxu0 0.0
    %985 = vmatpush1.msra.mxu0 %v596
    %986 = vmatprep.subr.mxu0 0.0
    %987 = vmatpush1.msra.mxu0 %v597
    %988 = vmatprep.subr.mxu0 0.0
    %989 = vmatpush1.msra.mxu0 %v598
    %990 = vmatprep.subr.mxu0 0.0
    %991 = vmatpush1.msra.mxu0 %v599
    %992 = vmatprep.subr.mxu0 0.0
    %993 = vmatpush1.msra.mxu0 %v600
    %994 = vmatprep.subr.mxu0 0.0
    %995 = vmatpush1.msra.mxu0 %v601
    %996 = vmatprep.subr.mxu0 0.0
    %997 = vmatpush1.msra.mxu0 %v602
    %998 = vmatprep.subr.mxu0 0.0
    %999 = vmatpush1.msra.mxu0 %v603
    %1000 = vmatprep.subr.mxu0 0.0
    %1001 = vmatpush1.msra.mxu0 %v604
    %1002 = vmatprep.mubr.f32.mxu0 %v231
    %1003 = vmatmul.mubr.f32.gmra.mrb[0].mxu0 %v214
    %v1004 = vpop.f32.mrb[0].mxu0
    %v1005 = vadd.f32 %v935, %v1004
    %v1006 = vpop.f32.mrb[0].mxu0
    %1007 = vdwg.mxu0
    %1008 = vmatprep.subr.mxu0 0.0
    %1009 = vmatpush1.msra.mxu0 %v605
    %1010 = vmatprep.subr.mxu0 0.0
    %1011 = vmatpush1.msra.mxu0 %v606
    %1012 = vmatprep.subr.mxu0 0.0
    %1013 = vmatpush1.msra.mxu0 %v607
    %1014 = vmatprep.subr.mxu0 0.0
    %1015 = vmatpush1.msra.mxu0 %v608
    %1016 = vmatprep.subr.mxu0 0.0
    %1017 = vmatpush1.msra.mxu0 %v609
    %1018 = vmatprep.subr.mxu0 0.0
    %1019 = vmatpush1.msra.mxu0 %v610
    %1020 = vmatprep.subr.mxu0 0.0
    %1021 = vmatpush1.msra.mxu0 %v611
    %1022 = vmatprep.subr.mxu0 0.0
    %1023 = vmatpush1.msra.mxu0 %v612
    %1024 = vmatprep.subr.mxu0 0.0
    %1025 = vmatpush1.msra.mxu0 %v613
    %1026 = vmatprep.subr.mxu0 0.0
    %1027 = vmatpush1.msra.mxu0 %v614
    %1028 = vmatprep.subr.mxu0 0.0
    %1029 = vmatpush1.msra.mxu0 %v615
    %1030 = vmatprep.subr.mxu0 0.0
    %1031 = vmatpush1.msra.mxu0 %v616
    %1032 = vmatprep.subr.mxu0 0.0
    %1033 = vmatpush1.msra.mxu0 %v617
    %1034 = vmatprep.subr.mxu0 0.0
    %1035 = vmatpush1.msra.mxu0 %v618
    %1036 = vmatprep.subr.mxu0 0.0
    %1037 = vmatpush1.msra.mxu0 %v619
    %1038 = vmatprep.subr.mxu0 0.0
    %1039 = vmatpush1.msra.mxu0 %v620
    %1040 = vmatprep.subr.mxu0 0.0
    %1041 = vmatpush1.msra.mxu0 %v621
    %1042 = vmatprep.subr.mxu0 0.0
    %1043 = vmatpush1.msra.mxu0 %v622
    %1044 = vmatprep.subr.mxu0 0.0
    %1045 = vmatpush1.msra.mxu0 %v623
    %1046 = vmatprep.subr.mxu0 0.0
    %1047 = vmatpush1.msra.mxu0 %v624
    %1048 = vmatprep.subr.mxu0 0.0
    %1049 = vmatpush1.msra.mxu0 %v625
    %1050 = vmatprep.subr.mxu0 0.0
    %1051 = vmatpush1.msra.mxu0 %v626
    %1052 = vmatprep.subr.mxu0 0.0
    %1053 = vmatpush1.msra.mxu0 %v627
    %1054 = vmatprep.subr.mxu0 0.0
    %1055 = vmatpush1.msra.mxu0 %v628
    %1056 = vmatprep.subr.mxu0 0.0
    %1057 = vmatpush1.msra.mxu0 %v629
    %1058 = vmatprep.subr.mxu0 0.0
    %1059 = vmatpush1.msra.mxu0 %v630
    %1060 = vmatprep.subr.mxu0 0.0
    %1061 = vmatpush1.msra.mxu0 %v631
    %1062 = vmatprep.subr.mxu0 0.0
    %1063 = vmatpush1.msra.mxu0 %v632
    %1064 = vmatprep.subr.mxu0 0.0
    %1065 = vmatpush1.msra.mxu0 %v633
    %1066 = vmatprep.subr.mxu0 0.0
    %1067 = vmatpush1.msra.mxu0 %v634
    %1068 = vmatprep.subr.mxu0 0.0
    %1069 = vmatpush1.msra.mxu0 %v635
    %1070 = vmatprep.subr.mxu0 0.0
    %1071 = vmatpush1.msra.mxu0 %v636
    %1072 = vmatprep.mubr.f32.mxu0 %v235
    %1073 = vmatmul.mubr.f32.gmra.mrb[0].mxu0 %v233
    %v1074 = vpop.f32.mrb[0].mxu0
    %v1075 = vadd.f32 %v1005, %v1074
    %v1076 = vpop.f32.mrb[0].mxu0
    %1077 = vdwg.mxu0
    %1078 = vmatprep.subr.mxu0 0.0
    %1079 = vmatpush1.msra.mxu0 %v637
    %1080 = vmatprep.subr.mxu0 0.0
    %1081 = vmatpush1.msra.mxu0 %v638
    %1082 = vmatprep.subr.mxu0 0.0
    %1083 = vmatpush1.msra.mxu0 %v639
    %1084 = vmatprep.subr.mxu0 0.0
    %1085 = vmatpush1.msra.mxu0 %v640
    %1086 = vmatprep.subr.mxu0 0.0
    %1087 = vmatpush1.msra.mxu0 %v641
    %1088 = vmatprep.subr.mxu0 0.0
    %1089 = vmatpush1.msra.mxu0 %v642
    %1090 = vmatprep.subr.mxu0 0.0
    %1091 = vmatpush1.msra.mxu0 %v643
    %1092 = vmatprep.subr.mxu0 0.0
    %1093 = vmatpush1.msra.mxu0 %v644
    %1094 = vmatprep.subr.mxu0 0.0
    %1095 = vmatpush1.msra.mxu0 %v645
    %1096 = vmatprep.subr.mxu0 0.0
    %1097 = vmatpush1.msra.mxu0 %v646
    %1098 = vmatprep.subr.mxu0 0.0
    %1099 = vmatpush1.msra.mxu0 %v647
    %1100 = vmatprep.subr.mxu0 0.0
    %1101 = vmatpush1.msra.mxu0 %v648
    %1102 = vmatprep.subr.mxu0 0.0
    %1103 = vmatpush1.msra.mxu0 %v649
    %1104 = vmatprep.subr.mxu0 0.0
    %1105 = vmatpush1.msra.mxu0 %v650
    %1106 = vmatprep.subr.mxu0 0.0
    %1107 = vmatpush1.msra.mxu0 %v651
    %1108 = vmatprep.subr.mxu0 0.0
    %1109 = vmatpush1.msra.mxu0 %v652
    %1110 = vmatprep.subr.mxu0 0.0
    %1111 = vmatpush1.msra.mxu0 0.0
    %1112 = vmatprep.subr.mxu0 0.0
    %1113 = vmatpush1.msra.mxu0 0.0
    %1114 = vmatprep.subr.mxu0 0.0
    %1115 = vmatpush1.msra.mxu0 0.0
    %1116 = vmatprep.subr.mxu0 0.0
    %1117 = vmatpush1.msra.mxu0 0.0
    %1118 = vmatprep.subr.mxu0 0.0
    %1119 = vmatpush1.msra.mxu0 0.0
    %1120 = vmatprep.subr.mxu0 0.0
    %1121 = vmatpush1.msra.mxu0 0.0
    %1122 = vmatprep.subr.mxu0 0.0
    %1123 = vmatpush1.msra.mxu0 0.0
    %1124 = vmatprep.subr.mxu0 0.0
    %1125 = vmatpush1.msra.mxu0 0.0
    %1126 = vmatprep.subr.mxu0 0.0
    %1127 = vmatpush1.msra.mxu0 0.0
    %1128 = vmatprep.subr.mxu0 0.0
    %1129 = vmatpush1.msra.mxu0 0.0
    %1130 = vmatprep.subr.mxu0 0.0
    %1131 = vmatpush1.msra.mxu0 0.0
    %1132 = vmatprep.subr.mxu0 0.0
    %1133 = vmatpush1.msra.mxu0 0.0
    %1134 = vmatprep.subr.mxu0 0.0
    %1135 = vmatpush1.msra.mxu0 0.0
    %1136 = vmatprep.subr.mxu0 0.0
    %1137 = vmatpush1.msra.mxu0 0.0
    %1138 = vmatprep.subr.mxu0 0.0
    %1139 = vmatpush1.msra.mxu0 0.0
    %1140 = vmatprep.subr.mxu0 0.0
    %1141 = vmatpush1.msra.mxu0 0.0
    %1142 = vmatprep.mubr.f32.mxu0 0.0
    %1143 = vmatmul.mubr.f32.gmra.mrb[0].mxu0 %v215
    %v1144 = vpop.f32.mrb[0].mxu0
    %v1145 = vadd.f32 %v1075, %v1144
    %v1146 = vpop.f32.mrb[0].mxu0
    %1147 = vdwg.mxu0
    %v1148 = vmax.f32 %v1145, 0.0
    %v1149 = vld [vmem:[%s4] sm:$0xff]
    %v1150 = vld [vmem:[%s4 + $0x8] sm:$0xff]
    %v1151 = vld [vmem:[%s4 + $0x10] sm:$0xff]
    %v1152 = vld [vmem:[%s4 + $0x18] sm:$0xff]
    %v1153 = vld [vmem:[%s4 + $0x20] sm:$0xff]
    %v1154 = vld [vmem:[%s4 + $0x28] sm:$0xff]
    %v1155 = vld [vmem:[%s4 + $0x30] sm:$0xff]
    %v1156 = vld [vmem:[%s4 + $0x38] sm:$0xff]
    %v1157 = vld [vmem:[%s4 + $0x40] sm:$0xff]
    %v1158 = vld [vmem:[%s4 + $0x48] sm:$0xff]
    %v1159 = vld [vmem:[%s4 + $0x50] sm:$0xff]
    %v1160 = vld [vmem:[%s4 + $0x58] sm:$0xff]
    %v1161 = vld [vmem:[%s4 + $0x60] sm:$0xff]
    %v1162 = vld [vmem:[%s4 + $0x68] sm:$0xff]
    %v1163 = vld [vmem:[%s4 + $0x70] sm:$0xff]
    %v1164 = vld [vmem:[%s4 + $0x78] sm:$0xff]
    %1165 = vmatprep.subr.mxu0 0.0
    %1166 = vmatpush1.msra.mxu0 %v1149
    %1167 = vmatprep.subr.mxu0 0.0
    %1168 = vmatpush1.msra.mxu0 %v1150
    %1169 = vmatprep.subr.mxu0 0.0
    %1170 = vmatpush1.msra.mxu0 %v1151
    %1171 = vmatprep.subr.mxu0 0.0
    %1172 = vmatpush1.msra.mxu0 %v1152
    %1173 = vmatprep.subr.mxu0 0.0
    %1174 = vmatpush1.msra.mxu0 %v1153
    %1175 = vmatprep.subr.mxu0 0.0
    %1176 = vmatpush1.msra.mxu0 %v1154
    %1177 = vmatprep.subr.mxu0 0.0
    %1178 = vmatpush1.msra.mxu0 %v1155
    %1179 = vmatprep.subr.mxu0 0.0
    %1180 = vmatpush1.msra.mxu0 %v1156
    %1181 = vmatprep.subr.mxu0 0.0
    %1182 = vmatpush1.msra.mxu0 %v1157
    %1183 = vmatprep.subr.mxu0 0.0
    %1184 = vmatpush1.msra.mxu0 %v1158
    %1185 = vmatprep.subr.mxu0 0.0
    %1186 = vmatpush1.msra.mxu0 %v1159
    %1187 = vmatprep.subr.mxu0 0.0
    %1188 = vmatpush1.msra.mxu0 %v1160
    %1189 = vmatprep.subr.mxu0 0.0
    %1190 = vmatpush1.msra.mxu0 %v1161
    %1191 = vmatprep.subr.mxu0 0.0
    %1192 = vmatpush1.msra.mxu0 %v1162
    %1193 = vmatprep.subr.mxu0 0.0
    %1194 = vmatpush1.msra.mxu0 %v1163
    %1195 = vmatprep.subr.mxu0 0.0
    %1196 = vmatpush1.msra.mxu0 %v1164
    %1197 = vmatprep.subr.mxu0 0.0
    %1198 = vmatpush1.msra.mxu0 0.0
    %1199 = vmatprep.subr.mxu0 0.0
    %1200 = vmatpush1.msra.mxu0 0.0
    %1201 = vmatprep.subr.mxu0 0.0
    %1202 = vmatpush1.msra.mxu0 0.0
    %1203 = vmatprep.subr.mxu0 0.0
    %1204 = vmatpush1.msra.mxu0 0.0
    %1205 = vmatprep.subr.mxu0 0.0
    %1206 = vmatpush1.msra.mxu0 0.0
    %1207 = vmatprep.subr.mxu0 0.0
    %1208 = vmatpush1.msra.mxu0 0.0
    %1209 = vmatprep.subr.mxu0 0.0
    %1210 = vmatpush1.msra.mxu0 0.0
    %1211 = vmatprep.subr.mxu0 0.0
    %1212 = vmatpush1.msra.mxu0 0.0
    %1213 = vmatprep.subr.mxu0 0.0
    %1214 = vmatpush1.msra.mxu0 0.0
    %1215 = vmatprep.subr.mxu0 0.0
    %1216 = vmatpush1.msra.mxu0 0.0
    %1217 = vmatprep.subr.mxu0 0.0
    %1218 = vmatpush1.msra.mxu0 0.0
    %1219 = vmatprep.subr.mxu0 0.0
    %1220 = vmatpush1.msra.mxu0 0.0
    %1221 = vmatprep.subr.mxu0 0.0
    %1222 = vmatpush1.msra.mxu0 0.0
    %1223 = vmatprep.subr.mxu0 0.0
    %1224 = vmatpush1.msra.mxu0 0.0
    %1225 = vmatprep.subr.mxu0 0.0
    %1226 = vmatpush1.msra.mxu0 0.0
    %1227 = vmatprep.subr.mxu0 0.0
    %1228 = vmatpush1.msra.mxu0 0.0
    %1229 = vmatprep.mubr.f32.mxu0 0.0
    %1230 = vmatmul.mubr.f32.gmra.mrb[0].mxu0 %v1148
    %v1231 = vpop.f32.mrb[0].mxu0
    %v1232 = vadd.f32 0.0, %v1231
    %v1233 = vpop.f32.mrb[0].mxu0
    %1234 = vdwg.mxu0
    %vm1235 = vcmask 263168
    %v1236 = vsel %vm1235, %v1232, -inf
    %1237 = vmax.xlane.f32.xlu0 %v1236
    %v1238 = vpop.xlane.xlu0 %1237
    %v1239 = vsub.f32 %v1232, %v1238
    %v1240 = vmul.f32 %v1239, 1.442695
    %v1241 = vpow.pop %v1240
    %v1242 = vsel %vm1235, %v1241, 0.0
    %1243 = vadd.xlane.f32.xlu0 %v1242
    %v1244 = vpop.xlane.xlu0 %1243
    %v1245 = vrcp.pop %v1244
    %v1246 = vmul.f32 %v1241, %v1245
    %1247 = vst.msk [vmem:[#allocation5] sm:$0x3] %vm1235, %v1246
    // Predicated region
    $region26: #{tpu_custom_call.1} parent=1 // pred_check
      _
    $region27: #{tpu_custom_call.1} parent=1 // pred_check_branch
      %1249 = sbr.rel (0) target = $region29
    $region28: #{tpu_custom_call.1} parent=1 // pred_region
      %s1251 = ssub.s32 32, 32
      %1252 = vsyncadd [#allocation4], %s1251
      %s1254 = sshll.u32 [#allocation5], 4
      %s1255 = int_to_ptr.vmem [resolvable:$true] %s1254
      %1257 = dma.vmem_to_hbm [thread:$0]  %s1255, 32, %s5, [#allocation4]
    $region29: #{tpu_custom_call.1} parent=1 // pred_fallthru
      _
    // Predicated region
    $region30: #{tpu_custom_call.1} parent=1 // pred_check
      _
    $region31: #{tpu_custom_call.1} parent=1 // pred_check_branch
      %1259 = sbr.rel (0) target = $region33
    $region32: #{tpu_custom_call.1} parent=1 // pred_region
      %1260 = dma.done [#allocation4], 32
    $region33: #{tpu_custom_call.1} parent=1 // pred_fallthru
      _
    %1261 = vsyncpa [#allocation3], 1
    %1262 = vsyncpa [#allocation4], 1

</llo_original>
